<compile_context>
chip_gen: v6e
topology: v6e:2x2x1
jax: 0.10.0
libtpu: 0.0.40
codegen_flags: <defaults>
</compile_context>

<pallas_src>
import jax
import jax.numpy as jnp
from jax.experimental import pallas as pl
from jax.experimental.pallas import tpu as pltpu

_MAX_BT = 64  # batch-tile size cap (single grid step below this)


# ----------------------------- fused Pallas kernel -----------------------------

def _cae_fused_kernel(x_ref, m_ref, we_ref, be_ref, wd_ref, bd_ref,
                      z_ref, out_ref):
    # Per grid step (one BT-element batch tile):
    #   x_ref : (BT, F, T)   motion features, frames on the lane axis
    #   m_ref : (BT, 1, T)   0/1 frame mask
    #   we_ref: (F, LZ)      encoder weight (pre-transposed), be_ref: (1, LZ)
    #   wd_ref: (LZ, F)      decoder weight (pre-transposed), bd_ref: (1, F)
    #   z_ref : (BT, LZ)     latent output
    #   out_ref:(BT, F, T)   reconstructed motion
    x = x_ref[...]                                           # (BT, F, T)
    m = m_ref[...]                                           # (BT, 1, T)

    # masked mean-pool over frames (lane-axis reduce -> XLU; recip -> EUP)
    count = jnp.maximum(jnp.sum(m, axis=-1), 1.0)            # (BT, 1)
    inv = pl.reciprocal(count, approx=True)                  # (BT, 1)
    pooled = jnp.sum(x * m, axis=-1) * inv                   # (BT, F)

    # encoder: z = pooled @ W_enc^T + b_enc                  (MXU)
    z = jnp.dot(pooled, we_ref[...],
                preferred_element_type=jnp.float32) + be_ref[...]    # (BT, LZ)
    z_ref[...] = z

    # decoder: feats = z @ W_dec^T + b_dec                   (MXU)
    feats = jnp.dot(z, wd_ref[...],
                    preferred_element_type=jnp.float32) + bd_ref[...]  # (BT, F)

    # broadcast over frames, zero outside the mask (VPU broadcast multiply)
    out_ref[...] = feats[:, :, None] * m                     # (BT, F, T)


def _cae_fused_call(x_bft, mask_b1t, w_enc, b_enc, w_dec, b_dec, bt):
    bsp, F, T = x_bft.shape
    LZ = w_enc.shape[1]

    grid_spec = pltpu.PrefetchScalarGridSpec(
        num_scalar_prefetch=0,
        grid=(bsp // bt,),
        in_specs=[
            pl.BlockSpec((bt, F, T), lambda b: (b, 0, 0)),   # x tile
            pl.BlockSpec((bt, 1, T), lambda b: (b, 0, 0)),   # mask tile
            pl.BlockSpec((F, LZ), lambda b: (0, 0)),         # W_enc^T (resident)
            pl.BlockSpec((1, LZ), lambda b: (0, 0)),         # b_enc
            pl.BlockSpec((LZ, F), lambda b: (0, 0)),         # W_dec^T (resident)
            pl.BlockSpec((1, F), lambda b: (0, 0)),          # b_dec
        ],
        out_specs=[
            pl.BlockSpec((bt, LZ), lambda b: (b, 0)),        # z
            pl.BlockSpec((bt, F, T), lambda b: (b, 0, 0)),   # output
        ],
    )

    z, out_bft = pl.pallas_call(
        _cae_fused_kernel,
        out_shape=(jax.ShapeDtypeStruct((bsp, LZ), jnp.float32),
                   jax.ShapeDtypeStruct((bsp, F, T), jnp.float32)),
        grid_spec=grid_spec,
        compiler_params=pltpu.CompilerParams(
            dimension_semantics=("parallel",),
            vmem_limit_bytes=32 * 1024 * 1024,
        ),
    )(x_bft, mask_b1t, w_enc, b_enc, w_dec, b_dec)
    return z, out_bft


@jax.jit
def _cae_forward_jit(x_bft, mask_bool, w_enc, b_enc, w_dec, b_dec):
    bs, F, T = x_bft.shape
    x = x_bft.astype(jnp.float32)
    mask = mask_bool.astype(jnp.float32).reshape(bs, 1, T)

    if bs <= _MAX_BT:
        bt, bsp = bs, bs                        # single grid step, no padding
    else:
        bt = _MAX_BT
        bsp = ((bs + bt - 1) // bt) * bt
        pad = bsp - bs
        if pad:
            x = jnp.pad(x, ((0, pad), (0, 0), (0, 0)))
            mask = jnp.pad(mask, ((0, pad), (0, 0), (0, 0)))

    z, out_bft = _cae_fused_call(x, mask, w_enc, b_enc, w_dec, b_dec, bt)
    return z[:bs], out_bft[:bs]


# ------------------------------- CAE wrapper -------------------------------

class CAE:
    """JAX/Pallas port of CAE.forward (pose_rep='xyz', outputxyz=False)."""

    def __init__(self, njoints, nfeats, latent_dim, seed=0):
        self.njoints = njoints
        self.nfeats = nfeats
        self.input_feats = njoints * nfeats
        self.latent_dim = latent_dim
        self.pose_rep = 'xyz'
        self.outputxyz = False

        # deterministic synthetic parameters, stored pre-transposed so the
        # kernel never needs an in-kernel transpose.
        k = jax.random.PRNGKey(seed)
        k1, k2, k3, k4 = jax.random.split(k, 4)
        s_in = 1.0 / jnp.sqrt(self.input_feats)
        s_lat = 1.0 / jnp.sqrt(latent_dim)
        self.w_enc = jax.random.uniform(               # == W_enc.T, (F, LZ)
            k1, (self.input_feats, latent_dim), jnp.float32, -s_in, s_in)
        self.b_enc = jax.random.uniform(
            k2, (1, latent_dim), jnp.float32, -s_in, s_in)
        self.w_dec = jax.random.uniform(               # == W_dec.T, (LZ, F)
            k3, (latent_dim, self.input_feats), jnp.float32, -s_lat, s_lat)
        self.b_dec = jax.random.uniform(
            k4, (1, self.input_feats), jnp.float32, -s_lat, s_lat)

    @staticmethod
    def lengths_to_mask(lengths, max_len):
        index = jnp.arange(max_len)[None, :]
        return index < lengths[:, None]

    def _run(self, x, mask):
        """x: (bs, njoints, nfeats, nframes); mask: (bs, nframes) bool."""
        bs, J, Fe, T = x.shape
        # contiguous (free) reshape to (bs, J*Fe, T) -- frames stay on lanes
        x_bft = x.reshape(bs, J * Fe, T)
        z, out_bft = _cae_forward_jit(
            x_bft, mask, self.w_enc, self.b_enc, self.w_dec, self.b_dec)
        out = out_bft.reshape(bs, J, Fe, T)   # contiguous (free) reshape back
        return z, out

    # -------- forward: exact dict semantics of CAE.forward --------

    def forward(self, batch):
        if self.outputxyz:
            pass  # TODO(synk): rot2xyz (SMPL) path not ported; pose_rep == 'xyz'
        elif self.pose_rep == 'xyz':
            batch['x_xyz'] = batch['x']
        z, output = self._run(batch['x'], batch['mask'])
        batch['z'] = z            # encoder(batch) contribution
        batch['output'] = output  # decoder(batch) contribution
        if self.outputxyz:
            pass
        elif self.pose_rep == 'xyz':
            batch['output_xyz'] = batch['output']
        return batch

    def return_latent(self, batch, seed=None):
        z, _ = self._run(batch['x'], batch['mask'])
        return z

    # TODO(synk): generate()/generate_one() (decoder-only sampling path) not
    # exposed as a standalone kernel here.


# ---------------------------------- main -----------------------------------

if __name__ == "__main__":
    bs, njoints, nfeats, nframes, latent_dim = 2, 4, 3, 16, 32
    F = njoints * nfeats

    key = jax.random.PRNGKey(0)
    kx, _ = jax.random.split(key)
    x = jax.random.normal(kx, (bs, njoints, nfeats, nframes), jnp.float32)
    lengths = jnp.array([nframes, nframes - 4], dtype=jnp.int32)
    mask = CAE.lengths_to_mask(lengths, nframes)          # (bs, nframes) bool

    model = CAE(njoints, nfeats, latent_dim, seed=0)
    batch = {'x': x, 'mask': mask, 'lengths': lengths,
             'y': jnp.zeros((bs,), jnp.int32)}

    out_batch = model.forward(batch)
    jax.block_until_ready(out_batch['output'])
    jax.block_until_ready(out_batch['z'])

    assert out_batch['output'].shape == (bs, njoints, nfeats, nframes)
    assert out_batch['z'].shape == (bs, latent_dim)
    assert out_batch['x_xyz'].shape == x.shape
    assert out_batch['output_xyz'].shape == (bs, njoints, nfeats, nframes)
    assert bool(jnp.all(jnp.isfinite(out_batch['output'])))
    # frames outside the mask must be exactly zero
    assert bool(jnp.all(jnp.where(mask[:, None, None, :],
                                  True, out_batch['output'] == 0.0)))

    # pure-JAX reference (same deterministic linear encoder/decoder)
    m_f = mask.astype(jnp.float32)
    cnt = jnp.maximum(m_f.sum(-1, keepdims=True), 1.0)                 # (bs,1)
    pooled = (x.reshape(bs, F, nframes) * m_f[:, None, :]).sum(-1) / cnt
    z_ref = pooled @ model.w_enc + model.b_enc                         # (bs,LZ)
    feats = z_ref @ model.w_dec + model.b_dec                          # (bs,F)
    out_ref = (feats[:, :, None] * m_f[:, None, :]).reshape(x.shape)
    assert jnp.allclose(out_batch['z'], z_ref, rtol=5e-2, atol=5e-2)
    assert jnp.allclose(out_batch['output'], out_ref, rtol=5e-2, atol=5e-2)

    print("KERNEL_OK")
</pallas_src>

<mosaic_0001>
module attributes {stable_mosaic.version = 11 : i64} {
  func.func @_cae_fused_kernel(%arg0: i32, %arg1: memref<2x12x16xf32, #tpu.memory_space<vmem>>, %arg2: memref<2x1x16xf32, #tpu.memory_space<vmem>>, %arg3: memref<12x32xf32, #tpu.memory_space<vmem>>, %arg4: memref<1x32xf32, #tpu.memory_space<vmem>>, %arg5: memref<32x12xf32, #tpu.memory_space<vmem>>, %arg6: memref<1x12xf32, #tpu.memory_space<vmem>>, %arg7: memref<2x32xf32, #tpu.memory_space<vmem>>, %arg8: memref<2x12x16xf32, #tpu.memory_space<vmem>>) attributes {dimension_semantics = [#tpu.dimension_semantics<parallel>], iteration_bounds = array<i64: 1>, scalar_prefetch = 0 : i64, scratch_operands = 0 : i64, tpu.core_type = #tpu.core_type<tc>, window_params = [{transform_indices = @transform_0, window_bounds = array<i64: 2, 12, 16>}, {transform_indices = @transform_1, window_bounds = array<i64: 2, 1, 16>}, {pipeline_mode = #tpu.pipeline_mode<synchronous>, transform_indices = @transform_2, window_bounds = array<i64: 12, 32>}, {pipeline_mode = #tpu.pipeline_mode<synchronous>, transform_indices = @transform_3, window_bounds = array<i64: 1, 32>}, {pipeline_mode = #tpu.pipeline_mode<synchronous>, transform_indices = @transform_4, window_bounds = array<i64: 32, 12>}, {pipeline_mode = #tpu.pipeline_mode<synchronous>, transform_indices = @transform_5, window_bounds = array<i64: 1, 12>}, {transform_indices = @transform_6, window_bounds = array<i64: 2, 32>}, {transform_indices = @transform_7, window_bounds = array<i64: 2, 12, 16>}]} {
    %c0 = arith.constant 0 : index
    %c0_0 = arith.constant 0 : index
    %c0_1 = arith.constant 0 : index
    %0 = vector.load %arg1[%c0, %c0_0, %c0_1] : memref<2x12x16xf32, #tpu.memory_space<vmem>>, vector<2x12x16xf32>
    %c0_2 = arith.constant 0 : index
    %c0_3 = arith.constant 0 : index
    %c0_4 = arith.constant 0 : index
    %1 = vector.load %arg2[%c0_2, %c0_3, %c0_4] : memref<2x1x16xf32, #tpu.memory_space<vmem>>, vector<2x1x16xf32>
    %cst = arith.constant dense<0.000000e+00> : vector<2x1xf32>
    %2 = vector.multi_reduction <add>, %1, %cst [2] : vector<2x1x16xf32> to vector<2x1xf32>
    %cst_5 = arith.constant 1.000000e+00 : f32
    %3 = vector.broadcast %cst_5 : f32 to vector<2x1xf32>
    %4 = arith.maximumf %2, %3 : vector<2x1xf32>
    %5 = tpu.reciprocal %4 {approx = true} : vector<2x1xf32> -> vector<2x1xf32>
    %6 = vector.broadcast %1 : vector<2x1x16xf32> to vector<2x12x16xf32>
    %7 = arith.mulf %0, %6 : vector<2x12x16xf32>
    %cst_6 = arith.constant dense<0.000000e+00> : vector<2x12xf32>
    %8 = vector.multi_reduction <add>, %7, %cst_6 [2] : vector<2x12x16xf32> to vector<2x12xf32>
    %9 = vector.broadcast %5 : vector<2x1xf32> to vector<2x12xf32>
    %10 = arith.mulf %8, %9 : vector<2x12xf32>
    %c0_7 = arith.constant 0 : index
    %c0_8 = arith.constant 0 : index
    %11 = vector.load %arg3[%c0_7, %c0_8] : memref<12x32xf32, #tpu.memory_space<vmem>>, vector<12x32xf32>
    %cst_9 = arith.constant dense<0.000000e+00> : vector<2x32xf32>
    %12 = tpu.matmul %10, %11, %cst_9 {dimension_numbers = #tpu.dot_dimension_numbers<[1], [0], [0], [1], [0, 0, 1, 1], [], []>} : vector<2x12xf32>, vector<12x32xf32>, vector<2x32xf32> -> vector<2x32xf32>
    %c0_10 = arith.constant 0 : index
    %c0_11 = arith.constant 0 : index
    %13 = vector.load %arg4[%c0_10, %c0_11] : memref<1x32xf32, #tpu.memory_space<vmem>>, vector<1x32xf32>
    %14 = vector.broadcast %13 : vector<1x32xf32> to vector<2x32xf32>
    %15 = arith.addf %12, %14 : vector<2x32xf32>
    %c0_12 = arith.constant 0 : index
    %c0_13 = arith.constant 0 : index
    %16 = vector.load %arg7[%c0_12, %c0_13] : memref<2x32xf32, #tpu.memory_space<vmem>>, vector<2x32xf32>
    tpu.vector_store %arg7[%c0_12, %c0_13], %15 {strides = array<i32>} : memref<2x32xf32, #tpu.memory_space<vmem>>, vector<2x32xf32>,
    %c0_14 = arith.constant 0 : index
    %c0_15 = arith.constant 0 : index
    %17 = vector.load %arg5[%c0_14, %c0_15] : memref<32x12xf32, #tpu.memory_space<vmem>>, vector<32x12xf32>
    %cst_16 = arith.constant dense<0.000000e+00> : vector<2x12xf32>
    %18 = tpu.matmul %15, %17, %cst_16 {dimension_numbers = #tpu.dot_dimension_numbers<[1], [0], [0], [1], [0, 0, 1, 1], [], []>} : vector<2x32xf32>, vector<32x12xf32>, vector<2x12xf32> -> vector<2x12xf32>
    %c0_17 = arith.constant 0 : index
    %c0_18 = arith.constant 0 : index
    %19 = vector.load %arg6[%c0_17, %c0_18] : memref<1x12xf32, #tpu.memory_space<vmem>>, vector<1x12xf32>
    %20 = vector.broadcast %19 : vector<1x12xf32> to vector<2x12xf32>
    %21 = arith.addf %18, %20 : vector<2x12xf32>
    %22 = vector.shape_cast %21 : vector<2x12xf32> to vector<2x12x1xf32>
    %23 = vector.broadcast %22 : vector<2x12x1xf32> to vector<2x12x16xf32>
    %24 = vector.broadcast %1 : vector<2x1x16xf32> to vector<2x12x16xf32>
    %25 = arith.mulf %23, %24 : vector<2x12x16xf32>
    %c0_19 = arith.constant 0 : index
    %c0_20 = arith.constant 0 : index
    %c0_21 = arith.constant 0 : index
    %26 = vector.load %arg8[%c0_19, %c0_20, %c0_21] : memref<2x12x16xf32, #tpu.memory_space<vmem>>, vector<2x12x16xf32>
    tpu.vector_store %arg8[%c0_19, %c0_20, %c0_21], %25 {strides = array<i32>} : memref<2x12x16xf32, #tpu.memory_space<vmem>>, vector<2x12x16xf32>,
    return
  }
  func.func @transform_0(%arg0: i32) -> (i32, i32, i32) {
    %c0_i32 = arith.constant 0 : i32
    %c0_i32_0 = arith.constant 0 : i32
    %c0_i32_1 = arith.constant 0 : i32
    return %arg0, %c0_i32, %c0_i32_0 : i32, i32, i32
  }
  func.func @transform_1(%arg0: i32) -> (i32, i32, i32) {
    %c0_i32 = arith.constant 0 : i32
    %c0_i32_0 = arith.constant 0 : i32
    %c0_i32_1 = arith.constant 0 : i32
    return %arg0, %c0_i32, %c0_i32_0 : i32, i32, i32
  }
  func.func @transform_2(%arg0: i32) -> (i32, i32) {
    %c0_i32 = arith.constant 0 : i32
    %c0_i32_0 = arith.constant 0 : i32
    %c0_i32_1 = arith.constant 0 : i32
    return %c0_i32, %c0_i32_0 : i32, i32
  }
  func.func @transform_3(%arg0: i32) -> (i32, i32) {
    %c0_i32 = arith.constant 0 : i32
    %c0_i32_0 = arith.constant 0 : i32
    %c0_i32_1 = arith.constant 0 : i32
    return %c0_i32, %c0_i32_0 : i32, i32
  }
  func.func @transform_4(%arg0: i32) -> (i32, i32) {
    %c0_i32 = arith.constant 0 : i32
    %c0_i32_0 = arith.constant 0 : i32
    %c0_i32_1 = arith.constant 0 : i32
    return %c0_i32, %c0_i32_0 : i32, i32
  }
  func.func @transform_5(%arg0: i32) -> (i32, i32) {
    %c0_i32 = arith.constant 0 : i32
    %c0_i32_0 = arith.constant 0 : i32
    %c0_i32_1 = arith.constant 0 : i32
    return %c0_i32, %c0_i32_0 : i32, i32
  }
  func.func @transform_6(%arg0: i32) -> (i32, i32) {
    %c0_i32 = arith.constant 0 : i32
    %c0_i32_0 = arith.constant 0 : i32
    return %arg0, %c0_i32 : i32, i32
  }
  func.func @transform_7(%arg0: i32) -> (i32, i32, i32) {
    %c0_i32 = arith.constant 0 : i32
    %c0_i32_0 = arith.constant 0 : i32
    %c0_i32_1 = arith.constant 0 : i32
    return %arg0, %c0_i32, %c0_i32_0 : i32, i32, i32
  }
}

</mosaic_0001>

<llo_original>
// kernel: _cae_forward_jit.1
$region0: #{_cae_forward_jit.1}
  #allocation0 [shape = 'u32[]', space=smem, size = 0x4, offset = 0x4, fixed_abs, tag = 'smem constant byte address 0x4 - core index']
  #allocation1 [shape = 'u32[144,128]{1,0:T(1,128)}', space=vmem, size = 0x12000, scoped, tag = 'internal scratch']
  %s0 = inlined_call_operand.vmem [shape: f32[2,12,16], index: 0, kind: input, shape index: {}]
  %s1 = inlined_call_operand.vmem [shape: f32[2,1,16], index: 1, kind: input, shape index: {}]
  %s2 = inlined_call_operand.vmem [shape: f32[12,32], index: 2, kind: input, shape index: {}]
  %s3 = inlined_call_operand.vmem [shape: f32[1,32], index: 3, kind: input, shape index: {}]
  %s4 = inlined_call_operand.vmem [shape: f32[32,12], index: 4, kind: input, shape index: {}]
  %s5 = inlined_call_operand.vmem [shape: f32[1,12], index: 5, kind: input, shape index: {}]
  %s6 = inlined_call_operand.hbm [shape: f32[2,32], index: 6, kind: output, shape index: {0}]
  %s7 = inlined_call_operand.vmem [shape: f32[2,12,16], index: 7, kind: output, shape index: {1}]
  %8 = xla_tuple %s6, %s7
  %s9 = sld [smem:[#allocation0]]
  $region42: #{_cae_forward_jit.1} parent=0
    _
  %s11 = ssub.s32 1, %s9
  %s12 = scalar_select 0, %s11, %s9
  $region1: #{_cae_forward_jit.1} parent=0
    #allocation2 [shape = 'u8[1024]{0}', space=vmem, size = 0x400, scoped, tag = 'output window, operand 0, single buffered']
    #allocation3 [shape = 's32[1]{0}', space=sflag, size = 0x4, scoped, tag = 'scoped memory for _cae_forward_jit.1']
    %13 = vsyncpa [#allocation3], 0
    // Predicated region
    $region2: #{_cae_forward_jit.1} parent=1 // pred_check
      _
    $region3: #{_cae_forward_jit.1} parent=1 // pred_check_branch
      %15 = sbr.rel (0) target = $region5
    $region4: #{_cae_forward_jit.1} parent=1 // pred_region
      _
    $region5: #{_cae_forward_jit.1} parent=1 // pred_fallthru
      _
    // Predicated region
    $region6: #{_cae_forward_jit.1} parent=1 // pred_check
      _
    $region7: #{_cae_forward_jit.1} parent=1 // pred_check_branch
      %17 = sbr.rel (0) target = $region9
    $region8: #{_cae_forward_jit.1} parent=1 // pred_region
      _
    $region9: #{_cae_forward_jit.1} parent=1 // pred_fallthru
      _
    // Predicated region
    $region10: #{_cae_forward_jit.1} parent=1 // pred_check
      _
    $region11: #{_cae_forward_jit.1} parent=1 // pred_check_branch
      %19 = sbr.rel (0) target = $region13
    $region12: #{_cae_forward_jit.1} parent=1 // pred_region
      _
    $region13: #{_cae_forward_jit.1} parent=1 // pred_fallthru
      _
    // Predicated region
    $region14: #{_cae_forward_jit.1} parent=1 // pred_check
      _
    $region15: #{_cae_forward_jit.1} parent=1 // pred_check_branch
      %21 = sbr.rel (0) target = $region17
    $region16: #{_cae_forward_jit.1} parent=1 // pred_region
      _
    $region17: #{_cae_forward_jit.1} parent=1 // pred_fallthru
      _
    // Predicated region
    $region18: #{_cae_forward_jit.1} parent=1 // pred_check
      _
    $region19: #{_cae_forward_jit.1} parent=1 // pred_check_branch
      %23 = sbr.rel (0) target = $region21
    $region20: #{_cae_forward_jit.1} parent=1 // pred_region
      _
    $region21: #{_cae_forward_jit.1} parent=1 // pred_fallthru
      _
    // Predicated region
    $region22: #{_cae_forward_jit.1} parent=1 // pred_check
      _
    $region23: #{_cae_forward_jit.1} parent=1 // pred_check_branch
      %25 = sbr.rel (0) target = $region25
    $region24: #{_cae_forward_jit.1} parent=1 // pred_region
      _
    $region25: #{_cae_forward_jit.1} parent=1 // pred_fallthru
      _
    %v26 = vld [vmem:[%s0] sm:$0xff]
    %v27 = vld [vmem:[%s0 + $0x8] sm:$0xf]
    %v28 = vld [vmem:[%s0 + $0x10] sm:$0xff]
    %v29 = vld [vmem:[%s0 + $0x18] sm:$0xf]
    %v30 = vld [vmem:[%s1] sm:$0x1]
    %v31 = vld [vmem:[%s1 + $0x1] sm:$0x1]
    %vm32 = vcmask 122880
    %v33 = vsel %vm32, %v30, 0.0
    %34 = vadd.xlane.f32.xlu0 %v33
    %v35 = vpop.xlane.xlu0 %34
    %v36 = vsel %vm32, %v31, 0.0
    %37 = vadd.xlane.f32.xlu0 %v36
    %v38 = vpop.xlane.xlu0 %37
    %v39 = vmax.f32 %v35, 1.0
    %v40 = vmax.f32 %v38, 1.0
    %v41 = vrcp.pop %v39
    %v42 = vrcp.pop %v40
    %v45 = vlaneseq
    %v46 = vshrl.u32 %v45, 7
    %v47 = vsub.s32 0, %v46
    %v48 = vrot.slane %v30, %v47
    %v49 = vlaneseq
    %v50 = vshrl.u32 %v49, 7
    %v51 = vsub.s32 0, %v50
    %v52 = vrot.slane %v31, %v51
    %v55 = vmul.f32 %v26, %v48
    %v56 = vmul.f32 %v27, %v48
    %v57 = vmul.f32 %v28, %v52
    %v58 = vmul.f32 %v29, %v52
    %vm59 = vcmask 130048
    %v60 = vsel %vm59, %v55, 0.0
    %61 = vadd.xlane.f32.xlu0 %v60
    %v62 = vpop.xlane.xlu0 %61
    %vm63 = vcmask 125952
    %v64 = vsel %vm63, %v56, 0.0
    %65 = vadd.xlane.f32.xlu0 %v64
    %v66 = vpop.xlane.xlu0 %65
    %v67 = vsel %vm59, %v57, 0.0
    %68 = vadd.xlane.f32.xlu0 %v67
    %v69 = vpop.xlane.xlu0 %68
    %v70 = vsel %vm63, %v58, 0.0
    %71 = vadd.xlane.f32.xlu0 %v70
    %v72 = vpop.xlane.xlu0 %71
    %v73 = vlaneseq
    %v74 = vshrl.u32 %v73, 7
    %v75 = vsub.s32 0, %v74
    %v76 = vrot.slane %v41, %v75
    %v77 = vlaneseq
    %v78 = vshrl.u32 %v77, 7
    %v79 = vsub.s32 0, %v78
    %v80 = vrot.slane %v42, %v79
    %v81 = vmul.f32 %v62, %v76
    %v82 = vmul.f32 %v66, %v76
    %v83 = vmul.f32 %v69, %v80
    %v84 = vmul.f32 %v72, %v80
    %v85 = vld [vmem:[%s2] sm:$0xff]
    %v86 = vld [vmem:[%s2 + $0x8] sm:$0xf]
    %v87 = vld [vmem:[%s3] sm:$0x1]
    %v89 = vlaneseq
    %v90 = vshrl.u32 %v89, 7
    %v91 = vsub.s32 0, %v90
    %v92 = vrot.slane %v87, %v91
    %v98 = vlaneseq
    %v99 = vand.u32 %v98, 127
    %v100 = vlaneseq
    %v101 = vshrl.u32 %v100, 7
    %v102 = vsub.s32 %v99, %v101
    %v103 = vrot.slane %v81, %v102
    %v104 = vadd.s32 %v99, 4294967288
    %v105 = vlaneseq
    %v106 = vshrl.u32 %v105, 7
    %v107 = vsub.s32 %v104, %v106
    %v108 = vrot.slane %v82, %v107
    %vm109 = vcmask 130112
    %v110 = vsel %vm109, %v108, %v103
    %v111 = vlaneseq
    %v112 = vshrl.u32 %v111, 7
    %v113 = vsub.s32 %v99, %v112
    %v114 = vrot.slane %v83, %v113
    %v115 = vlaneseq
    %v116 = vshrl.u32 %v115, 7
    %v117 = vsub.s32 %v104, %v116
    %v118 = vrot.slane %v84, %v117
    %v119 = vsel %vm109, %v118, %v114
    %vm120 = vcmask 1041409
    %v121 = vsel %vm120, %v119, %v110
    %vm122 = vcmask 97280
    %v123 = vsel %vm122, %v121, 0
    %vm125 = vcmask 1043456
    %v127 = vsel %vm125, %v86, 0
    %129 = vmatprep.subr.mxu0 0.0
    %130 = vmatpush1.msra.mxu0 0.0
    %131 = vmatprep.subr.mxu0 0.0
    %132 = vmatpush1.msra.mxu0 0.0
    %133 = vmatprep.subr.mxu0 0.0
    %134 = vmatpush1.msra.mxu0 0.0
    %135 = vmatprep.subr.mxu0 0.0
    %136 = vmatpush1.msra.mxu0 0.0
    %137 = vmatprep.subr.mxu0 0.0
    %138 = vmatpush1.msra.mxu0 0.0
    %139 = vmatprep.subr.mxu0 0.0
    %140 = vmatpush1.msra.mxu0 0.0
    %141 = vmatprep.subr.mxu0 0.0
    %142 = vmatpush1.msra.mxu0 0.0
    %143 = vmatprep.subr.mxu0 0.0
    %144 = vmatpush1.msra.mxu0 0.0
    %145 = vmatprep.subr.mxu0 0.0
    %146 = vmatpush1.msra.mxu0 0.0
    %147 = vmatprep.subr.mxu0 0.0
    %148 = vmatpush1.msra.mxu0 0.0
    %149 = vmatprep.subr.mxu0 0.0
    %150 = vmatpush1.msra.mxu0 0.0
    %151 = vmatprep.subr.mxu0 0.0
    %152 = vmatpush1.msra.mxu0 0.0
    %153 = vmatprep.subr.mxu0 0.0
    %154 = vmatpush1.msra.mxu0 0.0
    %155 = vmatprep.subr.mxu0 0.0
    %156 = vmatpush1.msra.mxu0 0.0
    %157 = vmatprep.subr.mxu0 0.0
    %158 = vmatpush1.msra.mxu0 %v127
    %159 = vmatprep.subr.mxu0 0.0
    %160 = vmatpush1.msra.mxu0 %v85
    %161 = vmatprep.subr.mxu0 0.0
    %162 = vmatpush2.msra.mxu0 0.0
    %163 = vmatprep.subr.mxu0 0.0
    %164 = vmatpush2.msra.mxu0 0.0
    %165 = vmatprep.subr.mxu0 0.0
    %166 = vmatpush2.msra.mxu0 0.0
    %167 = vmatprep.subr.mxu0 0.0
    %168 = vmatpush2.msra.mxu0 0.0
    %169 = vmatprep.subr.mxu0 0.0
    %170 = vmatpush2.msra.mxu0 0.0
    %171 = vmatprep.subr.mxu0 0.0
    %172 = vmatpush2.msra.mxu0 0.0
    %173 = vmatprep.subr.mxu0 0.0
    %174 = vmatpush2.msra.mxu0 0.0
    %175 = vmatprep.subr.mxu0 0.0
    %176 = vmatpush2.msra.mxu0 0.0
    %177 = vmatprep.subr.mxu0 0.0
    %178 = vmatpush2.msra.mxu0 0.0
    %179 = vmatprep.subr.mxu0 0.0
    %180 = vmatpush2.msra.mxu0 0.0
    %181 = vmatprep.subr.mxu0 0.0
    %182 = vmatpush2.msra.mxu0 0.0
    %183 = vmatprep.subr.mxu0 0.0
    %184 = vmatpush2.msra.mxu0 0.0
    %185 = vmatprep.subr.mxu0 0.0
    %186 = vmatpush2.msra.mxu0 0.0
    %187 = vmatprep.subr.mxu0 0.0
    %188 = vmatpush2.msra.mxu0 0.0
    %189 = vmatprep.subr.mxu0 0.0
    %190 = vmatpush2.msra.mxu0 0.0
    %191 = vmatprep.subr.mxu0 0.0
    %192 = vmatpush2.msra.mxu0 0.0
    %193 = vmatprep.mubr.f32.mxu0 0.0
    %194 = vmatmul.mubr.f32.gmra.mxu0 %v123
    %v195 = vpop.f32.mrf.mxu0
    %v196 = vadd.f32 %v92, %v195
    %v197 = vpop.f32.mrf.mxu0
    %198 = vdwg.mxu0
    %vm199 = vcmask 254976
    %200 = vst.msk [vmem:[#allocation2] sm:$0x3] %vm199, %v196
    %v201 = vld [vmem:[%s4] sm:$0xff]
    %v202 = vld [vmem:[%s4 + $0x8] sm:$0xff]
    %v203 = vld [vmem:[%s4 + $0x10] sm:$0xff]
    %v204 = vld [vmem:[%s4 + $0x18] sm:$0xff]
    %v205 = vld [vmem:[%s5] sm:$0x1]
    %v207 = vlaneseq
    %v208 = vshrl.u32 %v207, 7
    %v209 = vsub.s32 0, %v208
    %v210 = vrot.slane %v205, %v209
    %vm212 = vcmask 261120
    %v214 = vsel %vm212, %v196, 0
    %216 = vmatprep.subr.mxu0 0.0
    %217 = vmatpush1.msra.mxu0 0.0
    %218 = vmatprep.subr.mxu0 0.0
    %219 = vmatpush1.msra.mxu0 0.0
    %220 = vmatprep.subr.mxu0 0.0
    %221 = vmatpush1.msra.mxu0 0.0
    %222 = vmatprep.subr.mxu0 0.0
    %223 = vmatpush1.msra.mxu0 0.0
    %224 = vmatprep.subr.mxu0 0.0
    %225 = vmatpush1.msra.mxu0 0.0
    %226 = vmatprep.subr.mxu0 0.0
    %227 = vmatpush1.msra.mxu0 0.0
    %228 = vmatprep.subr.mxu0 0.0
    %229 = vmatpush1.msra.mxu0 0.0
    %230 = vmatprep.subr.mxu0 0.0
    %231 = vmatpush1.msra.mxu0 0.0
    %232 = vmatprep.subr.mxu0 0.0
    %233 = vmatpush1.msra.mxu0 0.0
    %234 = vmatprep.subr.mxu0 0.0
    %235 = vmatpush1.msra.mxu0 0.0
    %236 = vmatprep.subr.mxu0 0.0
    %237 = vmatpush1.msra.mxu0 0.0
    %238 = vmatprep.subr.mxu0 0.0
    %239 = vmatpush1.msra.mxu0 0.0
    %240 = vmatprep.subr.mxu0 0.0
    %241 = vmatpush1.msra.mxu0 %v204
    %242 = vmatprep.subr.mxu0 0.0
    %243 = vmatpush1.msra.mxu0 %v203
    %244 = vmatprep.subr.mxu0 0.0
    %245 = vmatpush1.msra.mxu0 %v202
    %246 = vmatprep.subr.mxu0 0.0
    %247 = vmatpush1.msra.mxu0 %v201
    %248 = vmatprep.subr.mxu0 0.0
    %249 = vmatpush2.msra.mxu0 0.0
    %250 = vmatprep.subr.mxu0 0.0
    %251 = vmatpush2.msra.mxu0 0.0
    %252 = vmatprep.subr.mxu0 0.0
    %253 = vmatpush2.msra.mxu0 0.0
    %254 = vmatprep.subr.mxu0 0.0
    %255 = vmatpush2.msra.mxu0 0.0
    %256 = vmatprep.subr.mxu0 0.0
    %257 = vmatpush2.msra.mxu0 0.0
    %258 = vmatprep.subr.mxu0 0.0
    %259 = vmatpush2.msra.mxu0 0.0
    %260 = vmatprep.subr.mxu0 0.0
    %261 = vmatpush2.msra.mxu0 0.0
    %262 = vmatprep.subr.mxu0 0.0
    %263 = vmatpush2.msra.mxu0 0.0
    %264 = vmatprep.subr.mxu0 0.0
    %265 = vmatpush2.msra.mxu0 0.0
    %266 = vmatprep.subr.mxu0 0.0
    %267 = vmatpush2.msra.mxu0 0.0
    %268 = vmatprep.subr.mxu0 0.0
    %269 = vmatpush2.msra.mxu0 0.0
    %270 = vmatprep.subr.mxu0 0.0
    %271 = vmatpush2.msra.mxu0 0.0
    %272 = vmatprep.subr.mxu0 0.0
    %273 = vmatpush2.msra.mxu0 0.0
    %274 = vmatprep.subr.mxu0 0.0
    %275 = vmatpush2.msra.mxu0 0.0
    %276 = vmatprep.subr.mxu0 0.0
    %277 = vmatpush2.msra.mxu0 0.0
    %278 = vmatprep.subr.mxu0 0.0
    %279 = vmatpush2.msra.mxu0 0.0
    %280 = vmatprep.mubr.f32.mxu0 0.0
    %281 = vmatmul.mubr.f32.gmra.mxu0 %v214
    %v282 = vpop.f32.mrf.mxu0
    %v283 = vadd.f32 %v210, %v282
    %v284 = vpop.f32.mrf.mxu0
    %285 = vdwg.mxu0
    %v286 = vlaneseq
    %v287 = vshrl.u32 %v286, 7
    %v288 = vsub.s32 0, %v287
    %v289 = vrot.slane %v283, %v288
    %291 = vbcast.lane.b32.xlu0 %v289, 256
    %v292 = vpop.permute.xlu0 %291
    %s294 = sor.u32 256, 8
    %295 = vbcast.lane.b32.xlu0 %v289, %s294
    %v296 = vpop.permute.xlu0 %295
    %v297 = vlaneseq
    %v298 = vshrl.u32 %v297, 7
    %v299 = vsub.s32 1, %v298
    %v300 = vrot.slane %v283, %v299
    %302 = vbcast.lane.b32.xlu0 %v300, 256
    %v303 = vpop.permute.xlu0 %302
    %s305 = sor.u32 256, 8
    %306 = vbcast.lane.b32.xlu0 %v300, %s305
    %v307 = vpop.permute.xlu0 %306
    %v308 = vmul.f32 %v292, %v48
    %v309 = vmul.f32 %v296, %v48
    %v310 = vmul.f32 %v303, %v52
    %v311 = vmul.f32 %v307, %v52
    %312 = vst.msk [vmem:[%s7] sm:$0xff] %vm59, %v308
    %313 = vst.msk [vmem:[%s7 + $0x8] sm:$0xf] %vm63, %v309
    %314 = vst.msk [vmem:[%s7 + $0x10] sm:$0xff] %vm59, %v310
    %315 = vst.msk [vmem:[%s7 + $0x18] sm:$0xf] %vm63, %v311
    // Predicated region
    $region26: #{_cae_forward_jit.1} parent=1 // pred_check
      _
    $region27: #{_cae_forward_jit.1} parent=1 // pred_check_branch
      %317 = sbr.rel (0) target = $region29
    $region28: #{_cae_forward_jit.1} parent=1 // pred_region
      %s319 = ssub.s32 32, 32
      %320 = vsyncadd [#allocation3], %s319
      %s322 = sshll.u32 [#allocation2], 4
      %s323 = int_to_ptr.vmem [resolvable:$true] %s322
      %325 = dma.vmem_to_hbm [thread:$0]  %s323, 32, %s6, [#allocation3]
    $region29: #{_cae_forward_jit.1} parent=1 // pred_fallthru
      _
    // Predicated region
    $region30: #{_cae_forward_jit.1} parent=1 // pred_check
      _
    $region31: #{_cae_forward_jit.1} parent=1 // pred_check_branch
      %327 = sbr.rel (0) target = $region33
    $region32: #{_cae_forward_jit.1} parent=1 // pred_region
      _
    $region33: #{_cae_forward_jit.1} parent=1 // pred_fallthru
      _
    // Predicated region
    $region34: #{_cae_forward_jit.1} parent=1 // pred_check
      _
    $region35: #{_cae_forward_jit.1} parent=1 // pred_check_branch
      %329 = sbr.rel (0) target = $region37
    $region36: #{_cae_forward_jit.1} parent=1 // pred_region
      %330 = dma.done [#allocation3], 32
    $region37: #{_cae_forward_jit.1} parent=1 // pred_fallthru
      _
    // Predicated region
    $region38: #{_cae_forward_jit.1} parent=1 // pred_check
      _
    $region39: #{_cae_forward_jit.1} parent=1 // pred_check_branch
      %332 = sbr.rel (0) target = $region41
    $region40: #{_cae_forward_jit.1} parent=1 // pred_region
      _
    $region41: #{_cae_forward_jit.1} parent=1 // pred_fallthru
      _
    %333 = vsyncpa [#allocation3], 1

</llo_original>
